<compile_context>
chip_gen: v5e
topology: v5e:2x2
jax: 0.10.0
libtpu: 0.0.40
codegen_flags: <defaults>
</compile_context>

<pallas_src>
import numpy as np
import jax
import jax.numpy as jnp
from jax.experimental import pallas as pl
from jax.experimental.pallas import tpu as pltpu


def _round_up(a, b):
    return (a + b - 1) // b * b


# --------------------------- Kernel 1: projection ---------------------------- #
def project_kernel(x_ref, w_ref, h_ref):
    # h = x @ W  (bf16 operands, f32 accumulation on the MXU), stored in bf16.
    h_ref[...] = jnp.dot(
        x_ref[...], w_ref[...], preferred_element_type=jnp.float32
    ).astype(jnp.bfloat16)


# ------------------ Kernel 2: flash-style masked GAT softmax ----------------- #
def gat_flash_kernel(occ_ref, hd_ref, hs_ref, adj_ref, atts_ref, attd_ref,
                     bias_ref, out_ref, adst_sc, m_sc, l_sc, acc_sc):
    i = pl.program_id(0)
    k = pl.program_id(1)
    n_k = pl.num_programs(1)

    @pl.when(k == 0)
    def _():
        # Destination logits <h_i, att_dst> -> (TM, 1), computed once per i.
        adst_sc[...] = jax.lax.dot_general(
            hd_ref[...], attd_ref[...],
            dimension_numbers=(((1,), (1,)), ((), ())),
            preferred_element_type=jnp.float32)
        m_sc[...] = jnp.full_like(m_sc[...], -1e30)
        l_sc[...] = jnp.zeros_like(l_sc[...])
        acc_sc[...] = jnp.zeros_like(acc_sc[...])

    # Block-sparse skip: only do softmax/aggregation work on occupied tiles.
    @pl.when(occ_ref[i * n_k + k] != 0)
    def _():
        h = hs_ref[...]                                           # (TK, Cop) bf16
        # Source logits as a row vector (1, TK) on the MXU (contract features).
        a_src = jax.lax.dot_general(
            atts_ref[...], h,
            dimension_numbers=(((1,), (1,)), ((), ())),
            preferred_element_type=jnp.float32)                   # (1, TK)

        e = adst_sc[...] + a_src                                  # (TM, TK)
        e = jnp.maximum(e, 0.2 * e)                               # leaky_relu(0.2)
        e = jnp.where(adj_ref[...] != 0, e, -1e30)                # single mask pass

        # Online softmax update (f32 m/l; masked lanes underflow to exactly 0).
        m_prev = m_sc[...]
        m_new = jnp.maximum(m_prev, jnp.max(e, axis=-1, keepdims=True))
        corr = jnp.exp(m_prev - m_new)
        p = jnp.exp(e - m_new)
        l_sc[...] = corr * l_sc[...] + jnp.sum(p, axis=-1, keepdims=True)
        acc_sc[...] = corr * acc_sc[...] + jnp.dot(
            p.astype(jnp.bfloat16), h, preferred_element_type=jnp.float32)
        m_sc[...] = m_new

    @pl.when(k == n_k - 1)
    def _():
        # Normalize AFTER aggregation: (TM, Cop) multiply + approx EUP reciprocal.
        inv_l = pl.reciprocal(l_sc[...], approx=True)
        out_ref[...] = (acc_sc[...] * inv_l + bias_ref[...]).astype(out_ref.dtype)


# ------------------------------- Wrapper ------------------------------------- #
def gat_conv_pallas(x, adj, W, att_src, att_dst, bias):
    """x: [N, Cin] f32, adj: [N, N] int mask (row=dst, col=src), W: [Cin, Cout]."""
    N, Cin = x.shape
    Cout = W.shape[1]

    Cip = _round_up(Cin, 128)
    # 256-wide MXUs on v6e/v7x: pad to 256 when Cout > 128, else 128.
    Cop = _round_up(Cout, 128) if Cout <= 128 else _round_up(Cout, 256)

    # Destination-row tile: 32-aligned (int8 sublane tiling), capped at 512.
    TM = min(_round_up(N, 32), 512)
    Np_r = _round_up(N, TM)
    # Source tile: lane dimension, 128-aligned, capped at 2048.
    TK = min(_round_up(N, 128), 2048)
    Np_c = _round_up(N, TK)
    # Node-feature array h must cover both paddings (and kernel-1 row tiling).
    Np_n = max(Np_r, Np_c)
    TR = min(Np_n, 1024)
    Np_n = _round_up(Np_n, TR)

    f32, bf16 = jnp.float32, jnp.bfloat16

    xp = jnp.zeros((Np_n, Cip), bf16).at[:N, :Cin].set(x.astype(bf16))
    Wp = jnp.zeros((Cip, Cop), bf16).at[:Cin, :Cout].set(W.astype(bf16))
    atts = jnp.zeros((1, Cop), bf16).at[:, :Cout].set(
        att_src.reshape(1, -1).astype(bf16))
    attd = jnp.zeros((1, Cop), bf16).at[:, :Cout].set(
        att_dst.reshape(1, -1).astype(bf16))
    bp = jnp.zeros((1, Cop), f32).at[:, :Cout].set(bias.reshape(1, -1).astype(f32))
    adjp = jnp.zeros((Np_r, Np_c), jnp.int8).at[:N, :N].set(adj.astype(jnp.int8))

    n_i, n_k = Np_r // TM, Np_c // TK
    # Per-(i, k) tile occupancy table (flattened to 1D to keep SMEM footprint low).
    occ = (adjp.reshape(n_i, TM, n_k, TK).astype(jnp.int32).sum(axis=(1, 3)) > 0)
    occ = occ.astype(jnp.int32).reshape(n_i * n_k)

    vmem_limit = 48 * 1024 * 1024

    # ------------------------- Kernel 1: h = x @ W ---------------------------- #
    h = pl.pallas_call(
        project_kernel,
        out_shape=jax.ShapeDtypeStruct((Np_n, Cop), bf16),
        grid=(Np_n // TR,),
        in_specs=[pl.BlockSpec((TR, Cip), lambda r: (r, 0)),
                  pl.BlockSpec((Cip, Cop), lambda r: (0, 0))],
        out_specs=pl.BlockSpec((TR, Cop), lambda r: (r, 0)),
        compiler_params=pltpu.CompilerParams(
            dimension_semantics=("parallel",),
            vmem_limit_bytes=vmem_limit),
        cost_estimate=pl.CostEstimate(
            flops=int(2 * Np_n * Cip * Cop),
            transcendentals=0,
            bytes_accessed=int(Np_n * Cip * 2 + Cip * Cop * 2 + Np_n * Cop * 2)),
    )(xp, Wp)

    # ------------- Kernel 2: flash softmax + aggregation --------------- #
    out = pl.pallas_call(
        gat_flash_kernel,
        out_shape=jax.ShapeDtypeStruct((Np_r, Cop), f32),
        grid_spec=pltpu.PrefetchScalarGridSpec(
            num_scalar_prefetch=1,
            grid=(n_i, n_k),
            in_specs=[
                pl.BlockSpec((TM, Cop), lambda i, k, occ: (i, 0)),   # h_dst (bf16)
                pl.BlockSpec((TK, Cop), lambda i, k, occ: (k, 0)),   # h_src (bf16)
                pl.BlockSpec((TM, TK), lambda i, k, occ: (i, k)),    # adjacency (int8)
                pl.BlockSpec((1, Cop), lambda i, k, occ: (0, 0)),    # att_src (bf16)
                pl.BlockSpec((1, Cop), lambda i, k, occ: (0, 0)),    # att_dst (bf16)
                pl.BlockSpec((1, Cop), lambda i, k, occ: (0, 0)),    # bias (f32)
            ],
            out_specs=pl.BlockSpec((TM, Cop), lambda i, k, occ: (i, 0)),
            scratch_shapes=[pltpu.VMEM((TM, 1), f32),    # a_dst logits (per i)
                            pltpu.VMEM((TM, 1), f32),    # running max m
                            pltpu.VMEM((TM, 1), f32),    # running denom l
                            pltpu.VMEM((TM, Cop), f32)]  # running numerator
        ),
        compiler_params=pltpu.CompilerParams(
            dimension_semantics=("parallel", "arbitrary"),
            vmem_limit_bytes=vmem_limit),
        cost_estimate=pl.CostEstimate(
            flops=int(2 * Np_r * Np_c * Cop + 8 * Np_r * Np_c
                      + 2 * n_i * Np_c * Cop + 2 * Np_r * Cop),
            transcendentals=int(Np_r * Np_c + Np_r * n_k),
            bytes_accessed=int(adjp.size + n_i * Np_c * Cop * 2
                               + Np_r * Cop * 2 + Np_r * Cop * 4)),
    )(occ, h, h, adjp, atts, attd, bp)

    return out[:N, :Cout]


# ---------------- Graph-construction glue (matches the torch loops) ---------- #
def build_artificial_adjacency(edge_index):
    """edge_index: int array [2, E]. Returns dense [E, E] int8 mask (symmetric,
    with self loops — GATConv add_self_loops=True)."""
    ei = jnp.asarray(edge_index)
    s, d = ei[0], ei[1]
    share = ((s[:, None] == s[None, :]) | (s[:, None] == d[None, :]) |
             (d[:, None] == s[None, :]) | (d[:, None] == d[None, :]))
    E = int(s.shape[0])
    adj = share | jnp.eye(E, dtype=jnp.bool_)
    return adj.astype(jnp.int8)


def gat_model2_forward(x, edge_index, params):
    adj = build_artificial_adjacency(edge_index)                 # int8 mask, on device
    return gat_conv_pallas(x, adj, params["W"], params["att_src"],
                           params["att_dst"], params["bias"])


# ----------------------- Pure-JAX reference (for check) ---------------------- #
def reference_forward(x, adj, W, att_src, att_dst, bias):
    hp = jax.lax.Precision.HIGHEST
    h = jnp.dot(x, W, precision=hp)
    a_src = h @ att_src
    a_dst = h @ att_dst
    e = a_dst[:, None] + a_src[None, :]
    e = jnp.where(e >= 0, e, 0.2 * e)
    e = jnp.where(adj > 0, e, -1e30)
    e = e - jnp.max(e, axis=-1, keepdims=True)
    p = jnp.exp(e)
    attn = p / jnp.sum(p, axis=-1, keepdims=True)
    return jnp.dot(attn, h, precision=hp) + bias[None, :]


# ---------------------------------- Main -------------------------------------- #
if __name__ == "__main__":
    in_channels, out_channels = 16, 32
    num_nodes, num_edges = 5, 8

    key = jax.random.PRNGKey(0)
    k_x, k_w, k_as, k_ad, k_b = jax.random.split(key, 5)

    # Original graph edges (edge_index) and per-edge embeddings (x).
    edge_index = np.array(
        [[0, 1, 2, 3, 0, 1, 2, 3],
         [1, 2, 3, 4, 2, 3, 4, 0]], dtype=np.int64)
    assert edge_index.max() < num_nodes
    x = jax.random.normal(k_x, (num_edges, in_channels), dtype=jnp.float32)

    # Deterministic GATConv parameters (glorot-style scales; small nonzero bias).
    w_scale = float(np.sqrt(6.0 / (in_channels + out_channels)))
    a_scale = float(np.sqrt(6.0 / (1 + out_channels)))
    params = {
        "W": jax.random.uniform(k_w, (in_channels, out_channels),
                                minval=-w_scale, maxval=w_scale, dtype=jnp.float32),
        "att_src": jax.random.uniform(k_as, (out_channels,),
                                      minval=-a_scale, maxval=a_scale, dtype=jnp.float32),
        "att_dst": jax.random.uniform(k_ad, (out_channels,),
                                      minval=-a_scale, maxval=a_scale, dtype=jnp.float32),
        "bias": 0.1 * jax.random.normal(k_b, (out_channels,), dtype=jnp.float32),
    }

    out = gat_model2_forward(x, edge_index, params)
    out = jax.block_until_ready(out)
    assert out.shape == (num_edges, out_channels)

    # Correctness vs. a plain-JAX f32 dense reference (kernel uses bf16 MXU
    # operands + approx reciprocal, hence mixed-precision tolerance).
    adj_f32 = build_artificial_adjacency(edge_index).astype(jnp.float32)
    ref = reference_forward(x, adj_f32, params["W"], params["att_src"],
                            params["att_dst"], params["bias"])
    np.testing.assert_allclose(np.asarray(out), np.asarray(ref),
                               rtol=5e-2, atol=5e-2)

    print("KERNEL_OK")
</pallas_src>

<mosaic_0001>
module attributes {stable_mosaic.version = 11 : i64} {
  func.func @project_kernel(%arg0: i32, %arg1: memref<128x128xbf16, #tpu.memory_space<vmem>>, %arg2: memref<128x128xbf16, #tpu.memory_space<vmem>>, %arg3: memref<128x128xbf16, #tpu.memory_space<vmem>>) attributes {dimension_semantics = [#tpu.dimension_semantics<parallel>], iteration_bounds = array<i64: 1>, scalar_prefetch = 0 : i64, scratch_operands = 0 : i64, tpu.core_type = #tpu.core_type<tc>, window_params = [{transform_indices = @transform_0, window_bounds = array<i64: 128, 128>}, {pipeline_mode = #tpu.pipeline_mode<synchronous>, transform_indices = @transform_1, window_bounds = array<i64: 128, 128>}, {transform_indices = @transform_2, window_bounds = array<i64: 128, 128>}]} {
    %c0 = arith.constant 0 : index
    %c0_0 = arith.constant 0 : index
    %0 = vector.load %arg1[%c0, %c0_0] : memref<128x128xbf16, #tpu.memory_space<vmem>>, vector<128x128xbf16>
    %c0_1 = arith.constant 0 : index
    %c0_2 = arith.constant 0 : index
    %1 = vector.load %arg2[%c0_1, %c0_2] : memref<128x128xbf16, #tpu.memory_space<vmem>>, vector<128x128xbf16>
    %cst = arith.constant dense<0.000000e+00> : vector<128x128xf32>
    %2 = tpu.matmul %0, %1, %cst {dimension_numbers = #tpu.dot_dimension_numbers<[1], [0], [0], [1], [0, 0, 1, 1], [], []>} : vector<128x128xbf16>, vector<128x128xbf16>, vector<128x128xf32> -> vector<128x128xf32>
    %3 = arith.truncf %2 : vector<128x128xf32> to vector<128x128xbf16>
    %c0_3 = arith.constant 0 : index
    %c0_4 = arith.constant 0 : index
    %4 = vector.load %arg3[%c0_3, %c0_4] : memref<128x128xbf16, #tpu.memory_space<vmem>>, vector<128x128xbf16>
    tpu.vector_store %arg3[%c0_3, %c0_4], %3 {strides = array<i32>} : memref<128x128xbf16, #tpu.memory_space<vmem>>, vector<128x128xbf16>,
    return
  }
  func.func @transform_0(%arg0: i32) -> (i32, i32) {
    %c0_i32 = arith.constant 0 : i32
    %c0_i32_0 = arith.constant 0 : i32
    return %arg0, %c0_i32 : i32, i32
  }
  func.func @transform_1(%arg0: i32) -> (i32, i32) {
    %c0_i32 = arith.constant 0 : i32
    %c0_i32_0 = arith.constant 0 : i32
    %c0_i32_1 = arith.constant 0 : i32
    return %c0_i32, %c0_i32_0 : i32, i32
  }
  func.func @transform_2(%arg0: i32) -> (i32, i32) {
    %c0_i32 = arith.constant 0 : i32
    %c0_i32_0 = arith.constant 0 : i32
    return %arg0, %c0_i32 : i32, i32
  }
}

</mosaic_0001>

<llo_original>
// kernel: tpu_custom_call.1
$region0: #{tpu_custom_call.1}
  #allocation0 [shape = 'u32[]', space=smem, size = 0x4, offset = 0x4, fixed_abs, tag = 'smem constant byte address 0x4 - core index']
  #allocation1 [shape = 'u32[72,128]{1,0:T(1,128)}', space=vmem, size = 0x9000, scoped, tag = 'internal scratch']
  %s0 = inlined_call_operand.hbm [shape: bf16[128,128], index: 0, kind: input, shape index: {}]
  %s1 = inlined_call_operand.hbm [shape: bf16[128,128], index: 1, kind: input, shape index: {}]
  %s2 = inlined_call_operand.hbm [shape: bf16[128,128], index: 2, kind: output, shape index: {}]
  %s3 = sld [smem:[#allocation0]]
  $region26: #{tpu_custom_call.1} parent=0
    _
  %s5 = ssub.s32 1, %s3
  %s6 = scalar_select 0, %s5, %s3
  $region1: #{tpu_custom_call.1} parent=0
    #allocation2 [shape = 'u8[32768]{0}', space=vmem, size = 0x8000, scoped, tag = 'input window, operand 0, single buffered']
    #allocation3 [shape = 's32[1]{0}', space=sflag, size = 0x4, scoped, tag = 'scoped memory for tpu_custom_call.1']
    #allocation4 [shape = 's32[1]{0}', space=sflag, size = 0x4, scoped, tag = 'scoped memory for tpu_custom_call.1']
    #allocation5 [shape = 'u8[32768]{0}', space=vmem, size = 0x8000, scoped, tag = 'input window, operand 1, single buffered']
    #allocation6 [shape = 's32[1]{0}', space=sflag, size = 0x4, scoped, tag = 'scoped memory for tpu_custom_call.1']
    #allocation7 [shape = 'u8[32768]{0}', space=vmem, size = 0x8000, scoped, tag = 'output window, operand 0, single buffered']
    %7 = vsyncpa [#allocation3], 0
    %8 = vsyncpa [#allocation6], 0
    %9 = vsyncpa [#allocation4], 0
    // Predicated region
    $region2: #{tpu_custom_call.1} parent=1 // pred_check
      _
    $region3: #{tpu_custom_call.1} parent=1 // pred_check_branch
      %11 = sbr.rel (0) target = $region5
    $region4: #{tpu_custom_call.1} parent=1 // pred_region
      %13 = vsyncadd [#allocation3], 0
      %s14 = sshll.u32 %s0, 4
      %s15 = int_to_ptr.hbm [resolvable:$true] %s14
      %s16 = sshll.u32 [#allocation2], 4
      %s17 = int_to_ptr.vmem [resolvable:$true] %s16
      %22 = dma.hbm_to_vmem [thread:$0]  %s15, 1024, %s17, [#allocation3], 64, 64, 4
    $region5: #{tpu_custom_call.1} parent=1 // pred_fallthru
      _
    // Predicated region
    $region6: #{tpu_custom_call.1} parent=1 // pred_check
      _
    $region7: #{tpu_custom_call.1} parent=1 // pred_check_branch
      %24 = sbr.rel (0) target = $region9
    $region8: #{tpu_custom_call.1} parent=1 // pred_region
      %26 = vsyncadd [#allocation6], 0
      %s27 = sshll.u32 %s1, 4
      %s28 = int_to_ptr.hbm [resolvable:$true] %s27
      %s29 = sshll.u32 [#allocation5], 4
      %s30 = int_to_ptr.vmem [resolvable:$true] %s29
      %35 = dma.hbm_to_vmem [thread:$0]  %s28, 1024, %s30, [#allocation6], 64, 64, 4
    $region9: #{tpu_custom_call.1} parent=1 // pred_fallthru
      _
    // Predicated region
    $region10: #{tpu_custom_call.1} parent=1 // pred_check
      _
    $region11: #{tpu_custom_call.1} parent=1 // pred_check_branch
      %37 = sbr.rel (0) target = $region13
    $region12: #{tpu_custom_call.1} parent=1 // pred_region
      %39 = dma.done [#allocation3], 1024
    $region13: #{tpu_custom_call.1} parent=1 // pred_fallthru
      _
    // Predicated region
    $region14: #{tpu_custom_call.1} parent=1 // pred_check
      _
    $region15: #{tpu_custom_call.1} parent=1 // pred_check_branch
      %41 = sbr.rel (0) target = $region17
    $region16: #{tpu_custom_call.1} parent=1 // pred_region
      %43 = dma.done [#allocation6], 1024
    $region17: #{tpu_custom_call.1} parent=1 // pred_fallthru
      _
    %v44 = vld [vmem:[#allocation2] sm:$0xf]
    %v45 = vld [vmem:[#allocation2 + $0x4] sm:$0xf]
    %v46 = vld [vmem:[#allocation2 + $0x8] sm:$0xf]
    %v47 = vld [vmem:[#allocation2 + $0xc] sm:$0xf]
    %v48 = vld [vmem:[#allocation2 + $0x10] sm:$0xf]
    %v49 = vld [vmem:[#allocation2 + $0x14] sm:$0xf]
    %v50 = vld [vmem:[#allocation2 + $0x18] sm:$0xf]
    %v51 = vld [vmem:[#allocation2 + $0x1c] sm:$0xf]
    %v52 = vld [vmem:[#allocation2 + $0x20] sm:$0xf]
    %v53 = vld [vmem:[#allocation2 + $0x24] sm:$0xf]
    %v54 = vld [vmem:[#allocation2 + $0x28] sm:$0xf]
    %v55 = vld [vmem:[#allocation2 + $0x2c] sm:$0xf]
    %v56 = vld [vmem:[#allocation2 + $0x30] sm:$0xf]
    %v57 = vld [vmem:[#allocation2 + $0x34] sm:$0xf]
    %v58 = vld [vmem:[#allocation2 + $0x38] sm:$0xf]
    %v59 = vld [vmem:[#allocation2 + $0x3c] sm:$0xf]
    %v60 = vld [vmem:[#allocation5] sm:$0xf]
    %v61 = vld [vmem:[#allocation5 + $0x4] sm:$0xf]
    %v62 = vld [vmem:[#allocation5 + $0x8] sm:$0xf]
    %v63 = vld [vmem:[#allocation5 + $0xc] sm:$0xf]
    %v64 = vld [vmem:[#allocation5 + $0x10] sm:$0xf]
    %v65 = vld [vmem:[#allocation5 + $0x14] sm:$0xf]
    %v66 = vld [vmem:[#allocation5 + $0x18] sm:$0xf]
    %v67 = vld [vmem:[#allocation5 + $0x1c] sm:$0xf]
    %v68 = vld [vmem:[#allocation5 + $0x20] sm:$0xf]
    %v69 = vld [vmem:[#allocation5 + $0x24] sm:$0xf]
    %v70 = vld [vmem:[#allocation5 + $0x28] sm:$0xf]
    %v71 = vld [vmem:[#allocation5 + $0x2c] sm:$0xf]
    %v72 = vld [vmem:[#allocation5 + $0x30] sm:$0xf]
    %v73 = vld [vmem:[#allocation5 + $0x34] sm:$0xf]
    %v74 = vld [vmem:[#allocation5 + $0x38] sm:$0xf]
    %v75 = vld [vmem:[#allocation5 + $0x3c] sm:$0xf]
    %v92 = vunpack.c.l.b16 %v44
    %v93 = vunpack.c.l.b16 %v45
    %v94 = vunpack.c.l.b16 %v46
    %v95 = vunpack.c.l.b16 %v47
    %v96 = vunpack.c.l.b16 %v48
    %v97 = vunpack.c.l.b16 %v49
    %v98 = vunpack.c.l.b16 %v50
    %v99 = vunpack.c.l.b16 %v51
    %v100 = vunpack.c.l.b16 %v52
    %v101 = vunpack.c.l.b16 %v53
    %v102 = vunpack.c.l.b16 %v54
    %v103 = vunpack.c.l.b16 %v55
    %v104 = vunpack.c.l.b16 %v56
    %v105 = vunpack.c.l.b16 %v57
    %v106 = vunpack.c.l.b16 %v58
    %v107 = vunpack.c.l.b16 %v59
    %v108 = vpack.c.b16 %v93, %v92
    %v109 = vpack.c.b16 %v95, %v94
    %v110 = vpack.c.b16 %v97, %v96
    %v111 = vpack.c.b16 %v99, %v98
    %v112 = vpack.c.b16 %v101, %v100
    %v113 = vpack.c.b16 %v103, %v102
    %v114 = vpack.c.b16 %v105, %v104
    %v115 = vpack.c.b16 %v107, %v106
    %v140 = vunpack.c.l.b16 %v60
    %v141 = vunpack.c.l.b16 %v61
    %v142 = vunpack.c.l.b16 %v62
    %v143 = vunpack.c.l.b16 %v63
    %v144 = vunpack.c.l.b16 %v64
    %v145 = vunpack.c.l.b16 %v65
    %v146 = vunpack.c.l.b16 %v66
    %v147 = vunpack.c.l.b16 %v67
    %v148 = vunpack.c.l.b16 %v68
    %v149 = vunpack.c.l.b16 %v69
    %v150 = vunpack.c.l.b16 %v70
    %v151 = vunpack.c.l.b16 %v71
    %v152 = vunpack.c.l.b16 %v72
    %v153 = vunpack.c.l.b16 %v73
    %v154 = vunpack.c.l.b16 %v74
    %v155 = vunpack.c.l.b16 %v75
    %v156 = vpack.c.b16 %v141, %v140
    %v157 = vpack.c.b16 %v143, %v142
    %v158 = vpack.c.b16 %v145, %v144
    %v159 = vpack.c.b16 %v147, %v146
    %v160 = vpack.c.b16 %v149, %v148
    %v161 = vpack.c.b16 %v151, %v150
    %v162 = vpack.c.b16 %v153, %v152
    %v163 = vpack.c.b16 %v155, %v154
    %172 = vmatpush.bf16.msra.mxu0 %v163
    %173 = vmatpush.bf16.msra.mxu0 %v162
    %174 = vmatpush.bf16.msra.mxu0 %v161
    %175 = vmatpush.bf16.msra.mxu0 %v160
    %176 = vmatpush.bf16.msra.mxu0 %v159
    %177 = vmatpush.bf16.msra.mxu0 %v158
    %178 = vmatpush.bf16.msra.mxu0 %v157
    %179 = vmatpush.bf16.msra.mxu0 %v156
    %180 = vmatmul.bf16.gmra.mxu0 %v108
    %v181 = vpop.f32.mrf.mxu0
    %v182 = vadd.f32 0.0, %v181
    %v183 = vpop.f32.mrf.mxu0
    %v184 = vadd.f32 0.0, %v183
    %185 = vmatmul.bf16.gmra.mxu0 %v109
    %v186 = vpop.f32.mrf.mxu0
    %v187 = vadd.f32 0.0, %v186
    %v188 = vpop.f32.mrf.mxu0
    %v189 = vadd.f32 0.0, %v188
    %190 = vmatmul.bf16.gmra.mxu0 %v110
    %v191 = vpop.f32.mrf.mxu0
    %v192 = vadd.f32 0.0, %v191
    %v193 = vpop.f32.mrf.mxu0
    %v194 = vadd.f32 0.0, %v193
    %195 = vmatmul.bf16.gmra.mxu0 %v111
    %v196 = vpop.f32.mrf.mxu0
    %v197 = vadd.f32 0.0, %v196
    %v198 = vpop.f32.mrf.mxu0
    %v199 = vadd.f32 0.0, %v198
    %200 = vmatmul.bf16.gmra.mxu0 %v112
    %v201 = vpop.f32.mrf.mxu0
    %v202 = vadd.f32 0.0, %v201
    %v203 = vpop.f32.mrf.mxu0
    %v204 = vadd.f32 0.0, %v203
    %205 = vmatmul.bf16.gmra.mxu0 %v113
    %v206 = vpop.f32.mrf.mxu0
    %v207 = vadd.f32 0.0, %v206
    %v208 = vpop.f32.mrf.mxu0
    %v209 = vadd.f32 0.0, %v208
    %210 = vmatmul.bf16.gmra.mxu0 %v114
    %v211 = vpop.f32.mrf.mxu0
    %v212 = vadd.f32 0.0, %v211
    %v213 = vpop.f32.mrf.mxu0
    %v214 = vadd.f32 0.0, %v213
    %215 = vmatmul.bf16.gmra.mxu0 %v115
    %v216 = vpop.f32.mrf.mxu0
    %v217 = vadd.f32 0.0, %v216
    %v218 = vpop.f32.mrf.mxu0
    %v219 = vadd.f32 0.0, %v218
    %220 = vdwg.mxu0
    %v221 = vpack.c.bf16 %v182, %v182
    %v222 = vpack.c.bf16 %v184, %v184
    %v223 = vpack.c.bf16 %v187, %v187
    %v224 = vpack.c.bf16 %v189, %v189
    %v225 = vpack.c.bf16 %v192, %v192
    %v226 = vpack.c.bf16 %v194, %v194
    %v227 = vpack.c.bf16 %v197, %v197
    %v228 = vpack.c.bf16 %v199, %v199
    %v229 = vpack.c.bf16 %v202, %v202
    %v230 = vpack.c.bf16 %v204, %v204
    %v231 = vpack.c.bf16 %v207, %v207
    %v232 = vpack.c.bf16 %v209, %v209
    %v233 = vpack.c.bf16 %v212, %v212
    %v234 = vpack.c.bf16 %v214, %v214
    %v235 = vpack.c.bf16 %v217, %v217
    %v236 = vpack.c.bf16 %v219, %v219
    %237 = vst [vmem:[#allocation7] sm:$0xf] %v221
    %238 = vst [vmem:[#allocation7 + $0x4] sm:$0xf] %v222
    %239 = vst [vmem:[#allocation7 + $0x8] sm:$0xf] %v223
    %240 = vst [vmem:[#allocation7 + $0xc] sm:$0xf] %v224
    %241 = vst [vmem:[#allocation7 + $0x10] sm:$0xf] %v225
    %242 = vst [vmem:[#allocation7 + $0x14] sm:$0xf] %v226
    %243 = vst [vmem:[#allocation7 + $0x18] sm:$0xf] %v227
    %244 = vst [vmem:[#allocation7 + $0x1c] sm:$0xf] %v228
    %245 = vst [vmem:[#allocation7 + $0x20] sm:$0xf] %v229
    %246 = vst [vmem:[#allocation7 + $0x24] sm:$0xf] %v230
    %247 = vst [vmem:[#allocation7 + $0x28] sm:$0xf] %v231
    %248 = vst [vmem:[#allocation7 + $0x2c] sm:$0xf] %v232
    %249 = vst [vmem:[#allocation7 + $0x30] sm:$0xf] %v233
    %250 = vst [vmem:[#allocation7 + $0x34] sm:$0xf] %v234
    %251 = vst [vmem:[#allocation7 + $0x38] sm:$0xf] %v235
    %252 = vst [vmem:[#allocation7 + $0x3c] sm:$0xf] %v236
    // Predicated region
    $region18: #{tpu_custom_call.1} parent=1 // pred_check
      _
    $region19: #{tpu_custom_call.1} parent=1 // pred_check_branch
      %254 = sbr.rel (0) target = $region21
    $region20: #{tpu_custom_call.1} parent=1 // pred_region
      %256 = vsyncadd [#allocation4], 0
      %s257 = sshll.u32 [#allocation7], 4
      %s258 = int_to_ptr.vmem [resolvable:$true] %s257
      %s259 = sshll.u32 %s2, 4
      %s260 = int_to_ptr.hbm [resolvable:$true] %s259
      %265 = dma.vmem_to_hbm [thread:$0]  %s258, 1024, %s260, [#allocation4], 64, 64, 4
    $region21: #{tpu_custom_call.1} parent=1 // pred_fallthru
      _
    // Predicated region
    $region22: #{tpu_custom_call.1} parent=1 // pred_check
      _
    $region23: #{tpu_custom_call.1} parent=1 // pred_check_branch
      %267 = sbr.rel (0) target = $region25
    $region24: #{tpu_custom_call.1} parent=1 // pred_region
      %269 = dma.done [#allocation4], 1024
    $region25: #{tpu_custom_call.1} parent=1 // pred_fallthru
      _
    %270 = vsyncpa [#allocation3], 1
    %271 = vsyncpa [#allocation6], 1
    %272 = vsyncpa [#allocation4], 1

</llo_original>
